<compile_context>
chip_gen: v7x
topology: tpu7x:2x2x1
jax: 0.10.0
libtpu: 0.0.40
codegen_flags: <defaults>
</compile_context>

<pallas_src>
import functools

import jax
import jax.numpy as jnp
from jax.experimental import pallas as pl
from jax.experimental.pallas import tpu as pltpu


def _psge2e_kernel(sm_ref, x_ref, w_ref, label_ref,
                   scores_ref, rowloss_ref,
                   xn_sc, m_sc, l_sc, t_sc,
                   *, needs_mask, last_cols):
    j = pl.program_id(1)
    n_j = pl.num_programs(1)

    # Hoist SMEM scalar reads above everything else (keeps the scalar path
    # off the critical bundles / away from DMA waits).
    s = sm_ref[0]
    m = sm_ref[1]

    # --- once per N tile (first C tile): normalize rows, reset accumulators --
    @pl.when(j == 0)
    def _():
        x = x_ref[...].astype(jnp.float32)                          # (TN, D)
        # normalizer(net_out, dim=1): x / max(||x||, 1e-6) == x * rsqrt(max(ss, 1e-12))
        inv = jax.lax.rsqrt(
            jnp.maximum(jnp.sum(x * x, axis=1, keepdims=True), 1e-12))
        xn_sc[...] = (x * inv).astype(xn_sc.dtype)                  # MXU dtype
        m_sc[...] = jnp.full_like(m_sc, -jnp.inf)
        l_sc[...] = jnp.zeros_like(l_sc)
        t_sc[...] = jnp.zeros_like(t_sc)

    # --- cosine scores on the MXU (bf16 operands by default, f32 accumulate) -
    cos = jnp.dot(xn_sc[...], w_ref[...], preferred_element_type=jnp.float32)
    scores = s * cos + m                                            # (TN, TC) f32
    scores_ref[...] = scores.astype(scores_ref.dtype)               # lane-dense store

    # --- online logsumexp over the C axis ------------------------------------
    def lse_update(tile_scores):
        tile_max = jnp.max(tile_scores, axis=1, keepdims=True)      # (TN, 1)
        m_new = jnp.maximum(m_sc[...], tile_max)
        alpha = jnp.exp(m_sc[...] - m_new)
        p = jnp.exp(tile_scores - m_new)                            # exp(-inf) -> 0
        l_sc[...] = alpha * l_sc[...] + jnp.sum(p, axis=1, keepdims=True)
        m_sc[...] = m_new

    if needs_mask:
        # Padded classes only exist on the last C tile; interior tiles need
        # no mask (one iota + compare + select fewer per step).
        @pl.when(j < n_j - 1)
        def _():
            lse_update(scores)

        @pl.when(j == n_j - 1)
        def _():
            col = jax.lax.broadcasted_iota(jnp.int32, scores.shape, 1)
            lse_update(jnp.where(col < last_cols, scores, -jnp.inf))
    else:
        lse_update(scores)

    # --- target score (labels < C, so padded columns can never match) --------
    tc = scores.shape[1]
    cls = j * tc + jax.lax.broadcasted_iota(jnp.int32, scores.shape, 1)
    t_sc[...] += jnp.sum(jnp.where(cls == label_ref[...], scores, 0.0),
                         axis=1, keepdims=True)

    # --- finalize per-row loss on the last C tile -----------------------------
    @pl.when(j == n_j - 1)
    def _():
        rowloss_ref[...] = m_sc[...] + jnp.log(l_sc[...]) - t_sc[...]


def _round_up(x, m):
    return (x + m - 1) // m * m


def psge2e_forward(net_out, w, label, s, m, *, tn_max=256, tc_max=1024,
                   mxu_dtype=jnp.bfloat16, scores_dtype=jnp.float32):
    """net_out: (N, D); w: (D, C); label: (N,) int; s, m: scalars.

    Returns (scores (N, C) scores_dtype, loss scalar f32).
    mxu_dtype=jnp.bfloat16 (default) feeds the MXU bf16 operands (f32 accum);
    pass jnp.float32 for bit-faithful f32 semantics.
    """
    N, D = net_out.shape
    Dw, C = w.shape
    assert Dw == D

    TN = min(tn_max, _round_up(N, 8))
    TC = min(tc_max, _round_up(C, 128))
    N_pad = _round_up(N, TN)
    C_pad = _round_up(C, TC)

    # Pre-normalize speaker weights ONCE here (instead of once per N tile in
    # the kernel), cast to the MXU operand dtype, then pad.  Padded columns
    # are exactly zero -> cos = 0 -> score = m; they are masked out of the
    # logsumexp on the last C tile inside the kernel.
    w32 = w.astype(jnp.float32)
    wn = w32 * jax.lax.rsqrt(
        jnp.maximum(jnp.sum(w32 * w32, axis=0, keepdims=True), 1e-12))
    wn = wn.astype(mxu_dtype)
    if C_pad != C:
        wn = jnp.pad(wn, ((0, 0), (0, C_pad - C)))

    x = net_out
    lbl = label.reshape(-1).astype(jnp.int32)
    if N_pad != N:
        x = jnp.pad(x, ((0, N_pad - N), (0, 0)))
        lbl = jnp.pad(lbl, (0, N_pad - N))
    lbl2d = lbl.reshape(N_pad, 1)

    sm = jnp.concatenate([jnp.asarray(s, jnp.float32).reshape(1),
                          jnp.asarray(m, jnp.float32).reshape(1)])

    grid = (N_pad // TN, C_pad // TC)
    last_cols = C - (grid[1] - 1) * TC          # real columns in the last C tile
    needs_mask = C_pad != C

    kernel = functools.partial(_psge2e_kernel,
                               needs_mask=needs_mask, last_cols=last_cols)

    mxu_bytes = jnp.dtype(mxu_dtype).itemsize
    cost = pl.CostEstimate(
        flops=int(2 * N_pad * C_pad * D + 8 * N_pad * C_pad),
        transcendentals=int(N_pad * C_pad + 4 * N_pad),
        bytes_accessed=int(x.size * x.dtype.itemsize
                           + wn.size * mxu_bytes * grid[0]
                           + N_pad * C_pad * jnp.dtype(scores_dtype).itemsize
                           + N_pad * 8),
    )

    scores_pad, rowloss = pl.pallas_call(
        kernel,
        grid=grid,
        out_shape=[
            jax.ShapeDtypeStruct((N_pad, C_pad), scores_dtype),
            jax.ShapeDtypeStruct((N_pad, 1), jnp.float32),
        ],
        in_specs=[
            pl.BlockSpec(memory_space=pltpu.MemorySpace.SMEM),       # (s, m)
            pl.BlockSpec((TN, D), lambda i, j: (i, 0)),              # embeddings
            pl.BlockSpec((D, TC), lambda i, j: (0, j)),              # normalized w
            pl.BlockSpec((TN, 1), lambda i, j: (i, 0)),              # labels
        ],
        out_specs=[
            pl.BlockSpec((TN, TC), lambda i, j: (i, j)),             # scores tile
            pl.BlockSpec((TN, 1), lambda i, j: (i, 0)),              # per-row loss
        ],
        scratch_shapes=[
            pltpu.VMEM((TN, D), mxu_dtype),     # normalized rows (MXU operand)
            pltpu.VMEM((TN, 1), jnp.float32),   # running max
            pltpu.VMEM((TN, 1), jnp.float32),   # running sum-exp
            pltpu.VMEM((TN, 1), jnp.float32),   # running target score
        ],
        compiler_params=pltpu.CompilerParams(
            dimension_semantics=("parallel", "arbitrary")),
        cost_estimate=cost,
    )(sm, x, wn, lbl2d)

    scores = scores_pad[:N, :C]
    loss = jnp.sum(rowloss[:N, 0]) / jnp.float32(N)
    return scores, loss


def _reference(net_out, w, label, s, m):
    xn = net_out / jnp.maximum(
        jnp.linalg.norm(net_out, axis=1, keepdims=True), 1e-6)
    wn = w / jnp.maximum(jnp.linalg.norm(w, axis=0, keepdims=True), 1e-6)
    scores = s * (xn @ wn) + m
    lse = jax.scipy.special.logsumexp(scores, axis=1)
    tgt = jnp.take_along_axis(scores, label.reshape(-1, 1), axis=1)[:, 0]
    return scores, jnp.mean(lse - tgt)


if __name__ == "__main__":
    # Small, deterministic setup consistent with the module's __init__.
    N = 8            # batch
    repr_dim = 32
    num_spkr = 16
    init_m = -0.1
    init_s = 10.0

    key = jax.random.PRNGKey(0)
    k_x, k_w, k_lbl = jax.random.split(key, 3)

    net_out = jax.random.normal(k_x, (N, repr_dim), dtype=jnp.float32)
    # xavier_normal_ init for w: std = gain * sqrt(2 / (fan_in + fan_out))
    xavier_std = (2.0 / (repr_dim + num_spkr)) ** 0.5
    w = xavier_std * jax.random.normal(k_w, (repr_dim, num_spkr), dtype=jnp.float32)
    label = jax.random.randint(k_lbl, (N,), 0, num_spkr, dtype=jnp.int32)

    ref_scores, ref_loss = _reference(net_out, w, label, init_s, init_m)

    # 1) Exact-semantics path (f32 MXU operands): tight tolerance.
    scores32, loss32 = psge2e_forward(net_out, w, label, init_s, init_m,
                                      mxu_dtype=jnp.float32)
    jax.block_until_ready((scores32, loss32))
    assert scores32.shape == (N, num_spkr)
    assert jnp.allclose(scores32, ref_scores, rtol=1e-4, atol=1e-4), (
        float(jnp.max(jnp.abs(scores32 - ref_scores))))
    assert jnp.allclose(loss32, ref_loss, rtol=1e-4, atol=1e-4), (
        float(loss32), float(ref_loss))

    # 2) Default fast path (bf16 MXU operands, f32 accumulation): loosened tol.
    scores_bf, loss_bf = psge2e_forward(net_out, w, label, init_s, init_m)
    jax.block_until_ready((scores_bf, loss_bf))
    assert scores_bf.shape == (N, num_spkr)
    assert jnp.allclose(scores_bf, ref_scores, rtol=5e-2, atol=1e-1), (
        float(jnp.max(jnp.abs(scores_bf - ref_scores))))
    assert jnp.allclose(loss_bf, ref_loss, rtol=5e-2, atol=1e-1), (
        float(loss_bf), float(ref_loss))

    print("KERNEL_OK")
</pallas_src>

<mosaic_0001>
module attributes {stable_mosaic.version = 11 : i64} {
  func.func @_psge2e_kernel(%arg0: i32, %arg1: i32, %arg2: memref<2xf32, #tpu.memory_space<smem>>, %arg3: memref<8x32xf32, #tpu.memory_space<vmem>>, %arg4: memref<32x128xf32, #tpu.memory_space<vmem>>, %arg5: memref<8x1xi32, #tpu.memory_space<vmem>>, %arg6: memref<8x128xf32, #tpu.memory_space<vmem>>, %arg7: memref<8x1xf32, #tpu.memory_space<vmem>>, %arg8: memref<8x32xf32, #tpu.memory_space<vmem>>, %arg9: memref<8x1xf32, #tpu.memory_space<vmem>>, %arg10: memref<8x1xf32, #tpu.memory_space<vmem>>, %arg11: memref<8x1xf32, #tpu.memory_space<vmem>>) attributes {dimension_semantics = [#tpu.dimension_semantics<parallel>, #tpu.dimension_semantics<arbitrary>], iteration_bounds = array<i64: 1, 1>, scalar_prefetch = 0 : i64, scratch_operands = 4 : i64, tpu.core_type = #tpu.core_type<tc>, window_params = [{transform_indices = @transform_0, window_bounds = array<i64: 2>}, {transform_indices = @transform_1, window_bounds = array<i64: 8, 32>}, {transform_indices = @transform_2, window_bounds = array<i64: 32, 128>}, {transform_indices = @transform_3, window_bounds = array<i64: 8, 1>}, {transform_indices = @transform_4, window_bounds = array<i64: 8, 128>}, {transform_indices = @transform_5, window_bounds = array<i64: 8, 1>}]} {
    %c0 = arith.constant 0 : index
    %0 = memref.load %arg2[%c0] : memref<2xf32, #tpu.memory_space<smem>>
    %c1 = arith.constant 1 : index
    %1 = memref.load %arg2[%c1] : memref<2xf32, #tpu.memory_space<smem>>
    %c0_i32 = arith.constant 0 : i32
    %2 = arith.cmpi eq, %arg1, %c0_i32 : i32
    %3 = arith.extui %2 : i1 to i32
    %c0_i32_0 = arith.constant 0 : i32
    %4 = arith.cmpi ne, %3, %c0_i32_0 : i32
    scf.if %4 {
      %c0_21 = arith.constant 0 : index
      %c0_22 = arith.constant 0 : index
      %36 = vector.load %arg3[%c0_21, %c0_22] : memref<8x32xf32, #tpu.memory_space<vmem>>, vector<8x32xf32>
      %37 = arith.mulf %36, %36 : vector<8x32xf32>
      %cst_23 = arith.constant dense<0.000000e+00> : vector<8xf32>
      %38 = vector.multi_reduction <add>, %37, %cst_23 [1] : vector<8x32xf32> to vector<8xf32>
      %39 = vector.shape_cast %38 : vector<8xf32> to vector<8x1xf32>
      %cst_24 = arith.constant 9.99999996E-13 : f32
      %40 = vector.broadcast %cst_24 : f32 to vector<8x1xf32>
      %41 = arith.maximumf %39, %40 : vector<8x1xf32>
      %42 = math.rsqrt %41 : vector<8x1xf32>
      %43 = vector.broadcast %42 : vector<8x1xf32> to vector<8x32xf32>
      %44 = arith.mulf %36, %43 : vector<8x32xf32>
      %c0_25 = arith.constant 0 : index
      %c0_26 = arith.constant 0 : index
      %45 = vector.load %arg8[%c0_25, %c0_26] : memref<8x32xf32, #tpu.memory_space<vmem>>, vector<8x32xf32>
      tpu.vector_store %arg8[%c0_25, %c0_26], %44 {strides = array<i32>} : memref<8x32xf32, #tpu.memory_space<vmem>>, vector<8x32xf32>,
      %cst_27 = arith.constant 0xFF800000 : f32
      %46 = vector.broadcast %cst_27 : f32 to vector<8x1xf32>
      %c0_28 = arith.constant 0 : index
      %c0_29 = arith.constant 0 : index
      %47 = vector.load %arg9[%c0_28, %c0_29] : memref<8x1xf32, #tpu.memory_space<vmem>>, vector<8x1xf32>
      tpu.vector_store %arg9[%c0_28, %c0_29], %46 {strides = array<i32>} : memref<8x1xf32, #tpu.memory_space<vmem>>, vector<8x1xf32>,
      %cst_30 = arith.constant 0.000000e+00 : f32
      %48 = vector.broadcast %cst_30 : f32 to vector<8x1xf32>
      %c0_31 = arith.constant 0 : index
      %c0_32 = arith.constant 0 : index
      %49 = vector.load %arg10[%c0_31, %c0_32] : memref<8x1xf32, #tpu.memory_space<vmem>>, vector<8x1xf32>
      tpu.vector_store %arg10[%c0_31, %c0_32], %48 {strides = array<i32>} : memref<8x1xf32, #tpu.memory_space<vmem>>, vector<8x1xf32>,
      %cst_33 = arith.constant 0.000000e+00 : f32
      %50 = vector.broadcast %cst_33 : f32 to vector<8x1xf32>
      %c0_34 = arith.constant 0 : index
      %c0_35 = arith.constant 0 : index
      %51 = vector.load %arg11[%c0_34, %c0_35] : memref<8x1xf32, #tpu.memory_space<vmem>>, vector<8x1xf32>
      tpu.vector_store %arg11[%c0_34, %c0_35], %50 {strides = array<i32>} : memref<8x1xf32, #tpu.memory_space<vmem>>, vector<8x1xf32>,
    } else {
    }
    %c0_1 = arith.constant 0 : index
    %c0_2 = arith.constant 0 : index
    %5 = vector.load %arg8[%c0_1, %c0_2] : memref<8x32xf32, #tpu.memory_space<vmem>>, vector<8x32xf32>
    %c0_3 = arith.constant 0 : index
    %c0_4 = arith.constant 0 : index
    %6 = vector.load %arg4[%c0_3, %c0_4] : memref<32x128xf32, #tpu.memory_space<vmem>>, vector<32x128xf32>
    %cst = arith.constant dense<0.000000e+00> : vector<8x128xf32>
    %7 = tpu.matmul %5, %6, %cst {dimension_numbers = #tpu.dot_dimension_numbers<[1], [0], [0], [1], [0, 0, 1, 1], [], []>} : vector<8x32xf32>, vector<32x128xf32>, vector<8x128xf32> -> vector<8x128xf32>
    %8 = vector.broadcast %0 : f32 to vector<8x128xf32>
    %9 = arith.mulf %8, %7 : vector<8x128xf32>
    %10 = vector.broadcast %1 : f32 to vector<8x128xf32>
    %11 = arith.addf %9, %10 : vector<8x128xf32>
    %c0_5 = arith.constant 0 : index
    %c0_6 = arith.constant 0 : index
    %12 = vector.load %arg6[%c0_5, %c0_6] : memref<8x128xf32, #tpu.memory_space<vmem>>, vector<8x128xf32>
    tpu.vector_store %arg6[%c0_5, %c0_6], %11 {strides = array<i32>} : memref<8x128xf32, #tpu.memory_space<vmem>>, vector<8x128xf32>,
    %c0_i32_7 = arith.constant 0 : i32
    %13 = arith.cmpi slt, %arg1, %c0_i32_7 : i32
    %14 = arith.extui %13 : i1 to i32
    %c0_i32_8 = arith.constant 0 : i32
    %15 = arith.cmpi ne, %14, %c0_i32_8 : i32
    scf.if %15 {
      %cst_21 = arith.constant dense<0xFF800000> : vector<8xf32>
      %36 = vector.multi_reduction <maximumf>, %11, %cst_21 [1] : vector<8x128xf32> to vector<8xf32>
      %37 = vector.shape_cast %36 : vector<8xf32> to vector<8x1xf32>
      %c0_22 = arith.constant 0 : index
      %c0_23 = arith.constant 0 : index
      %38 = vector.load %arg9[%c0_22, %c0_23] : memref<8x1xf32, #tpu.memory_space<vmem>>, vector<8x1xf32>
      %39 = arith.maximumf %38, %37 : vector<8x1xf32>
      %c0_24 = arith.constant 0 : index
      %c0_25 = arith.constant 0 : index
      %40 = vector.load %arg9[%c0_24, %c0_25] : memref<8x1xf32, #tpu.memory_space<vmem>>, vector<8x1xf32>
      %41 = arith.subf %40, %39 : vector<8x1xf32>
      %42 = math.exp %41 : vector<8x1xf32>
      %43 = vector.broadcast %39 : vector<8x1xf32> to vector<8x128xf32>
      %44 = arith.subf %11, %43 : vector<8x128xf32>
      %45 = math.exp %44 : vector<8x128xf32>
      %c0_26 = arith.constant 0 : index
      %c0_27 = arith.constant 0 : index
      %46 = vector.load %arg10[%c0_26, %c0_27] : memref<8x1xf32, #tpu.memory_space<vmem>>, vector<8x1xf32>
      %47 = arith.mulf %42, %46 : vector<8x1xf32>
      %cst_28 = arith.constant dense<0.000000e+00> : vector<8xf32>
      %48 = vector.multi_reduction <add>, %45, %cst_28 [1] : vector<8x128xf32> to vector<8xf32>
      %49 = vector.shape_cast %48 : vector<8xf32> to vector<8x1xf32>
      %50 = arith.addf %47, %49 : vector<8x1xf32>
      %c0_29 = arith.constant 0 : index
      %c0_30 = arith.constant 0 : index
      %51 = vector.load %arg10[%c0_29, %c0_30] : memref<8x1xf32, #tpu.memory_space<vmem>>, vector<8x1xf32>
      tpu.vector_store %arg10[%c0_29, %c0_30], %50 {strides = array<i32>} : memref<8x1xf32, #tpu.memory_space<vmem>>, vector<8x1xf32>,
      %c0_31 = arith.constant 0 : index
      %c0_32 = arith.constant 0 : index
      %52 = vector.load %arg9[%c0_31, %c0_32] : memref<8x1xf32, #tpu.memory_space<vmem>>, vector<8x1xf32>
      tpu.vector_store %arg9[%c0_31, %c0_32], %39 {strides = array<i32>} : memref<8x1xf32, #tpu.memory_space<vmem>>, vector<8x1xf32>,
    } else {
    }
    %c0_i32_9 = arith.constant 0 : i32
    %16 = arith.cmpi eq, %arg1, %c0_i32_9 : i32
    %17 = arith.extui %16 : i1 to i32
    %c0_i32_10 = arith.constant 0 : i32
    %18 = arith.cmpi ne, %17, %c0_i32_10 : i32
    scf.if %18 {
      %36 = tpu.iota {dimensions = array<i32: 1>} : vector<8x128xi32>
      %c16_i32 = arith.constant 16 : i32
      %37 = vector.broadcast %c16_i32 : i32 to vector<8x128xi32>
      %38 = arith.cmpi slt, %36, %37 : vector<8x128xi32>
      %cst_21 = arith.constant 0xFF800000 : f32
      %39 = vector.broadcast %cst_21 : f32 to vector<8x128xf32>
      %40 = arith.select %38, %11, %39 : vector<8x128xi1>, vector<8x128xf32>
      %cst_22 = arith.constant dense<0xFF800000> : vector<8xf32>
      %41 = vector.multi_reduction <maximumf>, %40, %cst_22 [1] : vector<8x128xf32> to vector<8xf32>
      %42 = vector.shape_cast %41 : vector<8xf32> to vector<8x1xf32>
      %c0_23 = arith.constant 0 : index
      %c0_24 = arith.constant 0 : index
      %43 = vector.load %arg9[%c0_23, %c0_24] : memref<8x1xf32, #tpu.memory_space<vmem>>, vector<8x1xf32>
      %44 = arith.maximumf %43, %42 : vector<8x1xf32>
      %c0_25 = arith.constant 0 : index
      %c0_26 = arith.constant 0 : index
      %45 = vector.load %arg9[%c0_25, %c0_26] : memref<8x1xf32, #tpu.memory_space<vmem>>, vector<8x1xf32>
      %46 = arith.subf %45, %44 : vector<8x1xf32>
      %47 = math.exp %46 : vector<8x1xf32>
      %48 = vector.broadcast %44 : vector<8x1xf32> to vector<8x128xf32>
      %49 = arith.subf %40, %48 : vector<8x128xf32>
      %50 = math.exp %49 : vector<8x128xf32>
      %c0_27 = arith.constant 0 : index
      %c0_28 = arith.constant 0 : index
      %51 = vector.load %arg10[%c0_27, %c0_28] : memref<8x1xf32, #tpu.memory_space<vmem>>, vector<8x1xf32>
      %52 = arith.mulf %47, %51 : vector<8x1xf32>
      %cst_29 = arith.constant dense<0.000000e+00> : vector<8xf32>
      %53 = vector.multi_reduction <add>, %50, %cst_29 [1] : vector<8x128xf32> to vector<8xf32>
      %54 = vector.shape_cast %53 : vector<8xf32> to vector<8x1xf32>
      %55 = arith.addf %52, %54 : vector<8x1xf32>
      %c0_30 = arith.constant 0 : index
      %c0_31 = arith.constant 0 : index
      %56 = vector.load %arg10[%c0_30, %c0_31] : memref<8x1xf32, #tpu.memory_space<vmem>>, vector<8x1xf32>
      tpu.vector_store %arg10[%c0_30, %c0_31], %55 {strides = array<i32>} : memref<8x1xf32, #tpu.memory_space<vmem>>, vector<8x1xf32>,
      %c0_32 = arith.constant 0 : index
      %c0_33 = arith.constant 0 : index
      %57 = vector.load %arg9[%c0_32, %c0_33] : memref<8x1xf32, #tpu.memory_space<vmem>>, vector<8x1xf32>
      tpu.vector_store %arg9[%c0_32, %c0_33], %44 {strides = array<i32>} : memref<8x1xf32, #tpu.memory_space<vmem>>, vector<8x1xf32>,
    } else {
    }
    %c128_i32 = arith.constant 128 : i32
    %19 = arith.muli %arg1, %c128_i32 : i32
    %20 = tpu.iota {dimensions = array<i32: 1>} : vector<8x128xi32>
    %21 = vector.broadcast %19 : i32 to vector<8x128xi32>
    %22 = arith.addi %21, %20 : vector<8x128xi32>
    %c0_11 = arith.constant 0 : index
    %c0_12 = arith.constant 0 : index
    %23 = vector.load %arg11[%c0_11, %c0_12] : memref<8x1xf32, #tpu.memory_space<vmem>>, vector<8x1xf32>
    %c0_13 = arith.constant 0 : index
    %c0_14 = arith.constant 0 : index
    %24 = vector.load %arg5[%c0_13, %c0_14] : memref<8x1xi32, #tpu.memory_space<vmem>>, vector<8x1xi32>
    %25 = vector.broadcast %24 : vector<8x1xi32> to vector<8x128xi32>
    %26 = arith.cmpi eq, %22, %25 : vector<8x128xi32>
    %cst_15 = arith.constant 0.000000e+00 : f32
    %27 = vector.broadcast %cst_15 : f32 to vector<8x128xf32>
    %28 = arith.select %26, %11, %27 : vector<8x128xi1>, vector<8x128xf32>
    %cst_16 = arith.constant dense<0.000000e+00> : vector<8xf32>
    %29 = vector.multi_reduction <add>, %28, %cst_16 [1] : vector<8x128xf32> to vector<8xf32>
    %30 = vector.shape_cast %29 : vector<8xf32> to vector<8x1xf32>
    %31 = arith.addf %23, %30 : vector<8x1xf32>
    %c0_17 = arith.constant 0 : index
    %c0_18 = arith.constant 0 : index
    %32 = vector.load %arg11[%c0_17, %c0_18] : memref<8x1xf32, #tpu.memory_space<vmem>>, vector<8x1xf32>
    tpu.vector_store %arg11[%c0_17, %c0_18], %31 {strides = array<i32>} : memref<8x1xf32, #tpu.memory_space<vmem>>, vector<8x1xf32>,
    %c0_i32_19 = arith.constant 0 : i32
    %33 = arith.cmpi eq, %arg1, %c0_i32_19 : i32
    %34 = arith.extui %33 : i1 to i32
    %c0_i32_20 = arith.constant 0 : i32
    %35 = arith.cmpi ne, %34, %c0_i32_20 : i32
    scf.if %35 {
      %c0_21 = arith.constant 0 : index
      %c0_22 = arith.constant 0 : index
      %36 = vector.load %arg9[%c0_21, %c0_22] : memref<8x1xf32, #tpu.memory_space<vmem>>, vector<8x1xf32>
      %c0_23 = arith.constant 0 : index
      %c0_24 = arith.constant 0 : index
      %37 = vector.load %arg10[%c0_23, %c0_24] : memref<8x1xf32, #tpu.memory_space<vmem>>, vector<8x1xf32>
      %38 = math.log %37 : vector<8x1xf32>
      %39 = arith.addf %36, %38 : vector<8x1xf32>
      %c0_25 = arith.constant 0 : index
      %c0_26 = arith.constant 0 : index
      %40 = vector.load %arg11[%c0_25, %c0_26] : memref<8x1xf32, #tpu.memory_space<vmem>>, vector<8x1xf32>
      %41 = arith.subf %39, %40 : vector<8x1xf32>
      %c0_27 = arith.constant 0 : index
      %c0_28 = arith.constant 0 : index
      %42 = vector.load %arg7[%c0_27, %c0_28] : memref<8x1xf32, #tpu.memory_space<vmem>>, vector<8x1xf32>
      tpu.vector_store %arg7[%c0_27, %c0_28], %41 {strides = array<i32>} : memref<8x1xf32, #tpu.memory_space<vmem>>, vector<8x1xf32>,
    } else {
    }
    return
  }
  func.func @transform_0(%arg0: i32, %arg1: i32) -> i32 {
    %c0_i32 = arith.constant 0 : i32
    %c0_i32_0 = arith.constant 0 : i32
    return %c0_i32 : i32
  }
  func.func @transform_1(%arg0: i32, %arg1: i32) -> (i32, i32) {
    %c0_i32 = arith.constant 0 : i32
    %c0_i32_0 = arith.constant 0 : i32
    return %arg0, %c0_i32 : i32, i32
  }
  func.func @transform_2(%arg0: i32, %arg1: i32) -> (i32, i32) {
    %c0_i32 = arith.constant 0 : i32
    %c0_i32_0 = arith.constant 0 : i32
    return %c0_i32, %arg1 : i32, i32
  }
  func.func @transform_3(%arg0: i32, %arg1: i32) -> (i32, i32) {
    %c0_i32 = arith.constant 0 : i32
    %c0_i32_0 = arith.constant 0 : i32
    return %arg0, %c0_i32 : i32, i32
  }
  func.func @transform_4(%arg0: i32, %arg1: i32) -> (i32, i32) {
    %c0_i32 = arith.constant 0 : i32
    return %arg0, %arg1 : i32, i32
  }
  func.func @transform_5(%arg0: i32, %arg1: i32) -> (i32, i32) {
    %c0_i32 = arith.constant 0 : i32
    %c0_i32_0 = arith.constant 0 : i32
    return %arg0, %c0_i32 : i32, i32
  }
}

</mosaic_0001>

<llo_original>
// kernel: tpu_custom_call.1
$region0: #{tpu_custom_call.1}
  #allocation0 [shape = 'u32[]', space=smem, size = 0x4, offset = 0x4, fixed_abs, tag = 'smem constant byte address 0x4 - core index']
  #allocation1 [shape = 'u32[144,128]{1,0:T(1,128)}', space=vmem, size = 0x12000, scoped, tag = 'internal scratch']
  #allocation2 [shape = 'f32[8,32]{1,0:T(8,128)}', space=vmem, size = 0x1000, scoped, tag = 'scratch operand']
  #allocation3 [shape = 'f32[8,1]{1,0:T(8,128)}', space=vmem, size = 0x1000, scoped, tag = 'scratch operand']
  #allocation4 [shape = 'f32[8,1]{1,0:T(8,128)}', space=vmem, size = 0x1000, scoped, tag = 'scratch operand']
  #allocation5 [shape = 'f32[8,1]{1,0:T(8,128)}', space=vmem, size = 0x1000, scoped, tag = 'scratch operand']
  %s0 = inlined_call_operand.vmem [shape: f32[2], index: 0, kind: input, shape index: {}]
  %s1 = inlined_call_operand.vmem [shape: f32[8,32], index: 1, kind: input, shape index: {}]
  %s2 = inlined_call_operand.hbm [shape: f32[32,128], index: 2, kind: input, shape index: {}]
  %s3 = inlined_call_operand.vmem [shape: s32[8,1], index: 3, kind: input, shape index: {}]
  %s4 = inlined_call_operand.hbm [shape: f32[8,128], index: 4, kind: output, shape index: {0}]
  %s5 = inlined_call_operand.vmem [shape: f32[8,1], index: 5, kind: output, shape index: {1}]
  %6 = xla_tuple %s4, %s5
  %s7 = sld [smem:[#allocation0]]
  $region58: #{tpu_custom_call.1} parent=0
    _
  %s9 = ssub.s32 1, %s7
  %s10 = scalar_select 0, %s9, %s7
  $region1: #{tpu_custom_call.1} parent=0
    #allocation6 [shape = 'u8[512]{0}', space=smem, size = 0x200, scoped, tag = 'input window, operand 0, single buffered']
    #allocation7 [shape = 's32[1]{0}', space=sflag, size = 0x4, scoped, tag = 'scoped memory for tpu_custom_call.1']
    #allocation8 [shape = 's32[1]{0}', space=sflag, size = 0x4, scoped, tag = 'scoped memory for tpu_custom_call.1']
    #allocation9 [shape = 's32[1]{0}', space=sflag, size = 0x4, scoped, tag = 'scoped memory for tpu_custom_call.1']
    #allocation10 [shape = 'u8[16384]{0}', space=vmem, size = 0x4000, scoped, tag = 'input window, operand 2, single buffered']
    #allocation11 [shape = 'u8[4096]{0}', space=vmem, size = 0x1000, scoped, tag = 'output window, operand 0, single buffered']
    %11 = vsyncpa [#allocation9], 0
    %12 = vsyncpa [#allocation7], 0
    %13 = vsyncpa [#allocation8], 0
    // Predicated region
    $region2: #{tpu_custom_call.1} parent=1 // pred_check
      _
    $region3: #{tpu_custom_call.1} parent=1 // pred_check_branch
      %15 = sbr.rel (0) target = $region5
    $region4: #{tpu_custom_call.1} parent=1 // pred_region
      %s17 = ssub.s32 16, 16
      %18 = vsyncadd [#allocation9], %s17
      %s20 = sshll.u32 %s0, 4
      %s21 = int_to_ptr.vmem [resolvable:$true] %s20
      %23 = dma.vmem_to_smem %s21, 16, [#allocation6], [#allocation9]
    $region5: #{tpu_custom_call.1} parent=1 // pred_fallthru
      _
    // Predicated region
    $region6: #{tpu_custom_call.1} parent=1 // pred_check
      _
    $region7: #{tpu_custom_call.1} parent=1 // pred_check_branch
      %25 = sbr.rel (0) target = $region9
    $region8: #{tpu_custom_call.1} parent=1 // pred_region
      _
    $region9: #{tpu_custom_call.1} parent=1 // pred_fallthru
      _
    // Predicated region
    $region10: #{tpu_custom_call.1} parent=1 // pred_check
      _
    $region11: #{tpu_custom_call.1} parent=1 // pred_check_branch
      %27 = sbr.rel (0) target = $region13
    $region12: #{tpu_custom_call.1} parent=1 // pred_region
      %s29 = ssub.s32 512, 512
      %30 = vsyncadd [#allocation7], %s29
      %s31 = sshll.u32 [#allocation10], 4
      %s32 = int_to_ptr.vmem [resolvable:$true] %s31
      %37 = dma.hbm_to_vmem [thread:$0]  %s2, 512, %s32, [#allocation7], 128, 128, 8
    $region13: #{tpu_custom_call.1} parent=1 // pred_fallthru
      _
    // Predicated region
    $region14: #{tpu_custom_call.1} parent=1 // pred_check
      _
    $region15: #{tpu_custom_call.1} parent=1 // pred_check_branch
      %39 = sbr.rel (0) target = $region17
    $region16: #{tpu_custom_call.1} parent=1 // pred_region
      _
    $region17: #{tpu_custom_call.1} parent=1 // pred_fallthru
      _
    // Predicated region
    $region18: #{tpu_custom_call.1} parent=1 // pred_check
      _
    $region19: #{tpu_custom_call.1} parent=1 // pred_check_branch
      %41 = sbr.rel (0) target = $region21
    $region20: #{tpu_custom_call.1} parent=1 // pred_region
      %42 = dma.done [#allocation9], 16
    $region21: #{tpu_custom_call.1} parent=1 // pred_fallthru
      _
    // Predicated region
    $region22: #{tpu_custom_call.1} parent=1 // pred_check
      _
    $region23: #{tpu_custom_call.1} parent=1 // pred_check_branch
      %44 = sbr.rel (0) target = $region25
    $region24: #{tpu_custom_call.1} parent=1 // pred_region
      %45 = dma.done [#allocation7], 512
    $region25: #{tpu_custom_call.1} parent=1 // pred_fallthru
      _
    %46 = sfence
    %s47 = sld [smem:[#allocation6]]
    %s48 = sld [smem:[#allocation6 + $0x1]]
    %p49 = scmp.eq.s32.totalorder 0, 0
    // Predicated region
    $region26: #{tpu_custom_call.1} parent=1 // pred_check
      %p50 = pneg %p49
    $region27: #{tpu_custom_call.1} parent=1 // pred_check_branch
      %52 = sbr.rel (%p50) target = $region29
    $region28: #{tpu_custom_call.1} parent=1 // pred_region
      %v53 = vld [vmem:[%s1] sm:$0xff]
      %v54 = vmul.f32 %v53, %v53
      %vm55 = vcmask 261120
      %v56 = vsel %vm55, %v54, 0.0
      %57 = vadd.xlane.f32.xlu0 %v56
      %v58 = vpop.xlane.xlu0 %57
      %v59 = vmax.f32 %v58, 1e-12
      %v60 = vrsqrt.pop %v59
      %v61 = vmul.f32 %v53, %v60
      %62 = vst.msk [vmem:[#allocation2] sm:$0xff] %vm55, %v61
      %vm63 = vcmask 7168
      %64 = vst.msk [vmem:[#allocation3] sm:$0xff] %vm63, -inf
      %65 = vst.msk [vmem:[#allocation4] sm:$0xff] %vm63, 0.0
      %66 = vst.msk [vmem:[#allocation5] sm:$0xff] %vm63, 0.0
    $region29: #{tpu_custom_call.1} parent=1 // pred_fallthru
      _
    %v67 = vld [vmem:[#allocation2] sm:$0xff]
    %v68 = vld [vmem:[#allocation10] sm:$0xff]
    %v69 = vld [vmem:[#allocation10 + $0x8] sm:$0xff]
    %v70 = vld [vmem:[#allocation10 + $0x10] sm:$0xff]
    %v71 = vld [vmem:[#allocation10 + $0x18] sm:$0xff]
    %vm72 = vcmask 261120
    %v74 = vsel %vm72, %v67, 0
    %76 = vmatprep.subr.mxu0 0.0
    %77 = vmatpush1.msra.mxu0 %v68
    %78 = vmatprep.subr.mxu0 0.0
    %79 = vmatpush1.msra.mxu0 %v69
    %80 = vmatprep.subr.mxu0 0.0
    %81 = vmatpush1.msra.mxu0 %v70
    %82 = vmatprep.subr.mxu0 0.0
    %83 = vmatpush1.msra.mxu0 %v71
    %84 = vmatprep.subr.mxu0 0.0
    %85 = vmatpush1.msra.mxu0 0.0
    %86 = vmatprep.subr.mxu0 0.0
    %87 = vmatpush1.msra.mxu0 0.0
    %88 = vmatprep.subr.mxu0 0.0
    %89 = vmatpush1.msra.mxu0 0.0
    %90 = vmatprep.subr.mxu0 0.0
    %91 = vmatpush1.msra.mxu0 0.0
    %92 = vmatprep.subr.mxu0 0.0
    %93 = vmatpush1.msra.mxu0 0.0
    %94 = vmatprep.subr.mxu0 0.0
    %95 = vmatpush1.msra.mxu0 0.0
    %96 = vmatprep.subr.mxu0 0.0
    %97 = vmatpush1.msra.mxu0 0.0
    %98 = vmatprep.subr.mxu0 0.0
    %99 = vmatpush1.msra.mxu0 0.0
    %100 = vmatprep.subr.mxu0 0.0
    %101 = vmatpush1.msra.mxu0 0.0
    %102 = vmatprep.subr.mxu0 0.0
    %103 = vmatpush1.msra.mxu0 0.0
    %104 = vmatprep.subr.mxu0 0.0
    %105 = vmatpush1.msra.mxu0 0.0
    %106 = vmatprep.subr.mxu0 0.0
    %107 = vmatpush1.msra.mxu0 0.0
    %108 = vmatprep.subr.mxu0 0.0
    %109 = vmatpush1.msra.mxu0 0.0
    %110 = vmatprep.subr.mxu0 0.0
    %111 = vmatpush1.msra.mxu0 0.0
    %112 = vmatprep.subr.mxu0 0.0
    %113 = vmatpush1.msra.mxu0 0.0
    %114 = vmatprep.subr.mxu0 0.0
    %115 = vmatpush1.msra.mxu0 0.0
    %116 = vmatprep.subr.mxu0 0.0
    %117 = vmatpush1.msra.mxu0 0.0
    %118 = vmatprep.subr.mxu0 0.0
    %119 = vmatpush1.msra.mxu0 0.0
    %120 = vmatprep.subr.mxu0 0.0
    %121 = vmatpush1.msra.mxu0 0.0
    %122 = vmatprep.subr.mxu0 0.0
    %123 = vmatpush1.msra.mxu0 0.0
    %124 = vmatprep.subr.mxu0 0.0
    %125 = vmatpush1.msra.mxu0 0.0
    %126 = vmatprep.subr.mxu0 0.0
    %127 = vmatpush1.msra.mxu0 0.0
    %128 = vmatprep.subr.mxu0 0.0
    %129 = vmatpush1.msra.mxu0 0.0
    %130 = vmatprep.subr.mxu0 0.0
    %131 = vmatpush1.msra.mxu0 0.0
    %132 = vmatprep.subr.mxu0 0.0
    %133 = vmatpush1.msra.mxu0 0.0
    %134 = vmatprep.subr.mxu0 0.0
    %135 = vmatpush1.msra.mxu0 0.0
    %136 = vmatprep.subr.mxu0 0.0
    %137 = vmatpush1.msra.mxu0 0.0
    %138 = vmatprep.subr.mxu0 0.0
    %139 = vmatpush1.msra.mxu0 0.0
    %140 = vmatprep.mubr.f32.mxu0 0.0
    %141 = vmatmul.mubr.f32.gmra.mrb[0].mxu0 %v74
    %v142 = vpop.f32.mrb[0].mxu0
    %v143 = vadd.f32 0.0, %v142
    %v144 = vpop.f32.mrb[0].mxu0
    %145 = vdwg.mxu0
    %v146 = vstv %s47
    %v147 = vmul.f32 %v146, %v143
    %v148 = vstv %s48
    %v149 = vadd.f32 %v147, %v148
    %150 = vst [vmem:[#allocation11] sm:$0xff] %v149
    %p151 = scmp.lt.s32.totalorder 0, 0
    // Predicated region
    $region30: #{tpu_custom_call.1} parent=1 // pred_check
      %p152 = pneg %p151
    $region31: #{tpu_custom_call.1} parent=1 // pred_check_branch
      %154 = sbr.rel (%p152) target = $region33
    $region32: #{tpu_custom_call.1} parent=1 // pred_region
      %155 = vmax.xlane.f32.xlu0 %v149
      %v156 = vpop.xlane.xlu0 %155
      %v157 = vld [vmem:[#allocation3] sm:$0xff]
      %v158 = vmax.f32 %v157, %v156
      %v159 = vsub.f32 %v157, %v158
      %v160 = vmul.f32 %v159, 1.442695
      %v161 = vpow.pop %v160
      %163 = vset.pattern.permute.xlu0 0
      %164 = vperm.xlu0 %163, %v158
      %v165 = vpop.permute.xlu0 %164
      %v167 = vsub.f32 %v149, %v165
      %v168 = vmul.f32 %v167, 1.442695
      %v169 = vpow.pop %v168
      %v170 = vld [vmem:[#allocation4] sm:$0xff]
      %v171 = vmul.f32 %v161, %v170
      %172 = vadd.xlane.f32.xlu0 %v169
      %v173 = vpop.xlane.xlu0 %172
      %v174 = vadd.f32 %v171, %v173
      %vm175 = vcmask 7168
      %176 = vst.msk [vmem:[#allocation4] sm:$0xff] %vm175, %v174
      %177 = vst.msk [vmem:[#allocation3] sm:$0xff] %vm175, %v158
    $region33: #{tpu_custom_call.1} parent=1 // pred_fallthru
      _
    // Predicated region
    $region34: #{tpu_custom_call.1} parent=1 // pred_check
      %p178 = pneg %p49
    $region35: #{tpu_custom_call.1} parent=1 // pred_check_branch
      %180 = sbr.rel (%p178) target = $region37
    $region36: #{tpu_custom_call.1} parent=1 // pred_region
      %v181 = vlaneseq
      %v182 = vand.u32 %v181, 127
      %vm183 = vcmp.lt.s32.totalorder %v182, 16
      %v184 = vsel %vm183, %v149, -inf
      %185 = vmax.xlane.f32.xlu0 %v184
      %v186 = vpop.xlane.xlu0 %185
      %v187 = vld [vmem:[#allocation3] sm:$0xff]
      %v188 = vmax.f32 %v187, %v186
      %v189 = vsub.f32 %v187, %v188
      %v190 = vmul.f32 %v189, 1.442695
      %v191 = vpow.pop %v190
      %193 = vset.pattern.permute.xlu0 0
      %194 = vperm.xlu0 %193, %v188
      %v195 = vpop.permute.xlu0 %194
      %v197 = vsub.f32 %v184, %v195
      %v198 = vmul.f32 %v197, 1.442695
      %v199 = vpow.pop %v198
      %v200 = vld [vmem:[#allocation4] sm:$0xff]
      %v201 = vmul.f32 %v191, %v200
      %202 = vadd.xlane.f32.xlu0 %v199
      %v203 = vpop.xlane.xlu0 %202
      %v204 = vadd.f32 %v201, %v203
      %vm205 = vcmask 7168
      %206 = vst.msk [vmem:[#allocation4] sm:$0xff] %vm205, %v204
      %207 = vst.msk [vmem:[#allocation3] sm:$0xff] %vm205, %v188
    $region37: #{tpu_custom_call.1} parent=1 // pred_fallthru
      _
    %s208 = smul.u32 0, 128
    %v209 = vlaneseq
    %v210 = vand.u32 %v209, 127
    %v211 = vstv %s208
    %v212 = vadd.s32 %v211, %v210
    %v213 = vld [vmem:[#allocation5] sm:$0xff]
    %v214 = vld [vmem:[%s3] sm:$0xff]
    %215 = vset.pattern.permute.xlu0 0
    %216 = vperm.xlu0 %215, %v214
    %v217 = vpop.permute.xlu0 %216
    %vm218 = vcmp.eq.s32.totalorder %v212, %v217
    %v219 = vsel %vm218, %v149, 0.0
    %220 = vadd.xlane.f32.xlu0 %v219
    %v221 = vpop.xlane.xlu0 %220
    %v222 = vadd.f32 %v213, %v221
    %vm223 = vcmask 7168
    %224 = vst.msk [vmem:[#allocation5] sm:$0xff] %vm223, %v222
    // Predicated region
    $region38: #{tpu_custom_call.1} parent=1 // pred_check
      %p225 = pneg %p49
    $region39: #{tpu_custom_call.1} parent=1 // pred_check_branch
      %227 = sbr.rel (%p225) target = $region41
    $region40: #{tpu_custom_call.1} parent=1 // pred_region
      %v228 = vld [vmem:[#allocation3] sm:$0xff]
      %v229 = vld [vmem:[#allocation4] sm:$0xff]
      %v230 = vlog2.pop %v229
      %v231 = vmul.f32 %v230, 0.6931472
      %v232 = vadd.f32 %v228, %v231
      %v233 = vld [vmem:[#allocation5] sm:$0xff]
      %v234 = vsub.f32 %v232, %v233
      %235 = vst.msk [vmem:[%s5] sm:$0xff] %vm223, %v234
    $region41: #{tpu_custom_call.1} parent=1 // pred_fallthru
      _
    // Predicated region
    $region42: #{tpu_custom_call.1} parent=1 // pred_check
      _
    $region43: #{tpu_custom_call.1} parent=1 // pred_check_branch
      %237 = sbr.rel (0) target = $region45
    $region44: #{tpu_custom_call.1} parent=1 // pred_region
      %s239 = ssub.s32 128, 128
      %240 = vsyncadd [#allocation8], %s239
      %s242 = sshll.u32 [#allocation11], 4
      %s243 = int_to_ptr.vmem [resolvable:$true] %s242
      %245 = dma.vmem_to_hbm [thread:$0]  %s243, 128, %s4, [#allocation8]
    $region45: #{tpu_custom_call.1} parent=1 // pred_fallthru
      _
    // Predicated region
    $region46: #{tpu_custom_call.1} parent=1 // pred_check
      _
    $region47: #{tpu_custom_call.1} parent=1 // pred_check_branch
      %247 = sbr.rel (0) target = $region49
    $region48: #{tpu_custom_call.1} parent=1 // pred_region
      _
    $region49: #{tpu_custom_call.1} parent=1 // pred_fallthru
      _
    // Predicated region
    $region50: #{tpu_custom_call.1} parent=1 // pred_check
      _
    $region51: #{tpu_custom_call.1} parent=1 // pred_check_branch
      %249 = sbr.rel (0) target = $region53
    $region52: #{tpu_custom_call.1} parent=1 // pred_region
      %250 = dma.done [#allocation8], 128
    $region53: #{tpu_custom_call.1} parent=1 // pred_fallthru
      _
    // Predicated region
    $region54: #{tpu_custom_call.1} parent=1 // pred_check
      _
    $region55: #{tpu_custom_call.1} parent=1 // pred_check_branch
      %252 = sbr.rel (0) target = $region57
    $region56: #{tpu_custom_call.1} parent=1 // pred_region
      _
    $region57: #{tpu_custom_call.1} parent=1 // pred_fallthru
      _
    %253 = vsyncpa [#allocation7], 1
    %254 = vsyncpa [#allocation8], 1
    %255 = vsyncpa [#allocation9], 1

</llo_original>
